<compile_context>
chip_gen: v5e
topology: v5e:2x2
jax: 0.10.0
libtpu: 0.0.40
codegen_flags: <defaults>
</compile_context>

<pallas_src>
import math

import jax
import jax.numpy as jnp
from jax.experimental import pallas as pl
from jax.experimental.pallas import tpu as pltpu

_K_PAD = 128   # padded row count of the combined table (MXU-native contraction)
_CHUNK = 256   # in-kernel sub-tile (rows): keeps the multi-hot in vregs


def _round_up(x, m):
    return (x + m - 1) // m * m


def _fixed_embedding_table(c_in, d_model):
    """Sinusoidal table identical to FixedEmbedding's (non-trainable) weight."""
    position = jnp.arange(c_in, dtype=jnp.float32)[:, None]
    div_term = jnp.exp(
        jnp.arange(0, d_model, 2, dtype=jnp.float32)
        * -(math.log(10000.0) / d_model)
    )
    w = jnp.zeros((c_in, d_model), jnp.float32)
    w = w.at[:, 0::2].set(jnp.sin(position * div_term))
    w = w.at[:, 1::2].set(jnp.cos(position * div_term))
    return w


def init_temporal_embedding(d_model, freq="h", table_dtype=jnp.float32):
    """Build once: combined padded table + per-feature index offsets."""
    # Column order of x[..., k] in the reference forward:
    #   0: month(13), 1: day(32), 2: weekday(7), 3: hour(24), 4: minute(4) if 't'
    sizes = [13, 32, 7, 24] + ([4] if freq == "t" else [])
    tables = [_fixed_embedding_table(c, d_model) for c in sizes]
    combined = jnp.concatenate(tables, axis=0)          # (K, d_model), K = 76/80
    k = combined.shape[0]
    assert k <= _K_PAD
    table = jnp.zeros((_K_PAD, d_model), jnp.float32).at[:k].set(combined)
    table = table.astype(table_dtype)                   # keep f32 for exactness

    offsets, acc = [], 0
    for s in sizes:
        offsets.append(acc)
        acc += s
    return {"table": table, "offsets": tuple(offsets), "tables": tables}


def _make_kernel(offsets, chunk, n_chunks, k_pad):
    """Kernel closure: offsets / chunking are Python constants."""
    nf = len(offsets)

    def kernel(idx_ref, table_ref, o_ref):
        # idx_ref:   (tile_m, F) int32 — raw time features (offsets added here)
        # table_ref: (k_pad, d_model) — whole-array VMEM resident, single copy
        # o_ref:     (tile_m, d_model)
        table = table_ref[...]

        def body(c, carry):
            r0 = pl.multiple_of(c * chunk, chunk)
            idx = idx_ref[pl.ds(r0, chunk), :]                     # (chunk, F)
            lanes = jax.lax.broadcasted_iota(jnp.int32, (chunk, k_pad), 1)
            # Feature index ranges are disjoint -> OR chain, single cast.
            hot = lanes == (idx[:, 0:1] + offsets[0])
            for f in range(1, nf):
                hot = hot | (lanes == (idx[:, f:f + 1] + offsets[f]))
            multihot = hot.astype(table.dtype)                     # exact 0/1
            # Summed nf-way embedding gather == multi-hot @ table on the MXU.
            o_ref[pl.ds(r0, chunk), :] = jnp.dot(
                multihot, table, preferred_element_type=jnp.float32
            ).astype(o_ref.dtype)
            return carry

        jax.lax.fori_loop(0, n_chunks, body, 0, unroll=True)

    return kernel


def temporal_embedding(x, params, *, tile_m=4096, out_dtype=jnp.float32):
    """x: (B, L, F >= nf) integer time features. Returns (B, L, d_model)."""
    table = params["table"]          # (K_PAD, d_model)
    offsets = params["offsets"]      # python tuple, length nf
    nf = len(offsets)
    k_pad, d_model = table.shape

    B, L, F = x.shape
    assert F >= nf, "x must carry at least the freq-implied time features"
    M = B * L

    idx = x.reshape(M, F)
    if idx.dtype != jnp.int32:
        idx = idx.astype(jnp.int32)

    out_itemsize = jnp.dtype(out_dtype).itemsize

    # --- tile sizing: VMEM-aware (v7x 64 MiB/TC vs 128 MiB on v5e/v6e) -------
    try:
        vmem_cap = int(pltpu.get_tpu_info().vmem_capacity_bytes)
    except Exception:
        vmem_cap = 64 * 1024 * 1024                      # conservative (v7x)
    out_budget = vmem_cap // 8                           # output double-buffer budget
    tile_m = min(tile_m, max(_CHUNK, out_budget // (2 * d_model * out_itemsize)))
    # >= 2 grid steps when M permits, so "parallel" can shard on v7x's 2 TCs.
    if M >= 2 * _CHUNK:
        tile_m = min(tile_m, _round_up(pl.cdiv(M, 2), _CHUNK))
    tile_m = max(8, min(tile_m, _round_up(M, 8)))
    chunk = min(_CHUNK, tile_m)
    tile_m = _round_up(tile_m, chunk)                    # kernel needs tile_m % chunk == 0
    grid = pl.cdiv(M, tile_m)                            # ragged last block is masked

    needed = (k_pad * d_model * table.dtype.itemsize     # table (single-buffered)
              + 2 * tile_m * F * 4                       # idx double buffer
              + 2 * tile_m * d_model * out_itemsize      # out double buffer
              + 2 * chunk * k_pad * 4)                   # multi-hot / matmul slack
    vmem_limit = int(min(vmem_cap - 8 * 1024 * 1024,
                         max(32 * 1024 * 1024, 2 * needed)))

    kernel = _make_kernel(offsets, chunk, tile_m // chunk, k_pad)

    out = pl.pallas_call(
        kernel,
        out_shape=jax.ShapeDtypeStruct((M, d_model), out_dtype),
        grid_spec=pltpu.PrefetchScalarGridSpec(
            num_scalar_prefetch=0,
            grid=(grid,),
            in_specs=[
                pl.BlockSpec((tile_m, F), lambda i: (i, 0)),
                # Whole table resident in VMEM once; never re-fetched, no
                # second pipeline buffer.
                pl.BlockSpec(memory_space=pltpu.MemorySpace.VMEM),
            ],
            out_specs=pl.BlockSpec((tile_m, d_model), lambda i: (i, 0)),
        ),
        compiler_params=pltpu.CompilerParams(
            dimension_semantics=("parallel",),           # no cross-tile reduction
            vmem_limit_bytes=vmem_limit,
        ),
    )(idx, table)

    return out.reshape(B, L, d_model)


if __name__ == "__main__":
    # Module config: embed_type='fixed', freq='h' -> 4 time features; d_model=32.
    d_model = 32
    B, L = 2, 8

    params = init_temporal_embedding(d_model, freq="h")

    key = jax.random.PRNGKey(0)
    km, kd, kw, kh = jax.random.split(key, 4)
    month = jax.random.randint(km, (B, L), 0, 13)
    day = jax.random.randint(kd, (B, L), 0, 32)
    weekday = jax.random.randint(kw, (B, L), 0, 7)
    hour = jax.random.randint(kh, (B, L), 0, 24)
    x = jnp.stack([month, day, weekday, hour], axis=-1).astype(jnp.int32)  # (B,L,4)

    # f32 output path: exact match against the fixed-embedding gather-sum.
    y = jax.block_until_ready(temporal_embedding(x, params))

    y_ref = 0.0
    for k, tbl in enumerate(params["tables"]):
        y_ref = y_ref + tbl[x[:, :, k]]

    assert y.shape == (B, L, d_model)
    assert y.dtype == jnp.float32
    assert jnp.allclose(y, y_ref, atol=1e-5, rtol=1e-5)

    # bf16 output path (halves the dominant HBM write in a bf16 model);
    # table stays f32 so the only error is the final bf16 rounding.
    y_bf16 = jax.block_until_ready(
        temporal_embedding(x, params, out_dtype=jnp.bfloat16)
    )
    assert jnp.allclose(y_bf16.astype(jnp.float32), y_ref, atol=3e-2, rtol=3e-2)

    print("KERNEL_OK")
</pallas_src>

<mosaic_0001>
module attributes {stable_mosaic.version = 11 : i64} {
  func.func @kernel(%arg0: i32, %arg1: memref<16x4xi32, #tpu.memory_space<vmem>>, %arg2: memref<128x32xf32, #tpu.memory_space<vmem>>, %arg3: memref<16x32xf32, #tpu.memory_space<vmem>>) attributes {dimension_semantics = [#tpu.dimension_semantics<parallel>], iteration_bounds = array<i64: 1>, scalar_prefetch = 0 : i64, scratch_operands = 0 : i64, tpu.core_type = #tpu.core_type<tc>, window_params = [{transform_indices = @transform_0, window_bounds = array<i64: 16, 4>}, {pipeline_mode = #tpu.pipeline_mode<synchronous>, transform_indices = @transform_1, window_bounds = array<i64: 128, 32>}, {transform_indices = @transform_2, window_bounds = array<i64: 16, 32>}]} {
    %c0 = arith.constant 0 : index
    %c0_0 = arith.constant 0 : index
    %0 = vector.load %arg2[%c0, %c0_0] : memref<128x32xf32, #tpu.memory_space<vmem>>, vector<128x32xf32>
    %c0_i32 = arith.constant 0 : i32
    %c16_i32 = arith.constant 16 : i32
    %1 = arith.muli %c0_i32, %c16_i32 : i32
    %2 = tpu.assume_multiple %1, 16 : i32
    %3 = arith.index_cast %2 : i32 to index
    %c0_1 = arith.constant 0 : index
    %4 = vector.load %arg1[%3, %c0_1] : memref<16x4xi32, #tpu.memory_space<vmem>>, vector<16x4xi32>
    %5 = tpu.iota {dimensions = array<i32: 1>} : vector<16x128xi32>
    %6 = vector.extract_strided_slice %4 {offsets = [0, 0], sizes = [16, 1], strides = [1, 1]} : vector<16x4xi32> to vector<16x1xi32>
    %c0_i32_2 = arith.constant 0 : i32
    %7 = vector.broadcast %c0_i32_2 : i32 to vector<16x1xi32>
    %8 = arith.addi %6, %7 : vector<16x1xi32>
    %9 = vector.broadcast %8 : vector<16x1xi32> to vector<16x128xi32>
    %10 = arith.cmpi eq, %5, %9 : vector<16x128xi32>
    %11 = vector.extract_strided_slice %4 {offsets = [0, 1], sizes = [16, 1], strides = [1, 1]} : vector<16x4xi32> to vector<16x1xi32>
    %c13_i32 = arith.constant 13 : i32
    %12 = vector.broadcast %c13_i32 : i32 to vector<16x1xi32>
    %13 = arith.addi %11, %12 : vector<16x1xi32>
    %14 = vector.broadcast %13 : vector<16x1xi32> to vector<16x128xi32>
    %15 = arith.cmpi eq, %5, %14 : vector<16x128xi32>
    %16 = arith.ori %10, %15 : vector<16x128xi1>
    %17 = vector.extract_strided_slice %4 {offsets = [0, 2], sizes = [16, 1], strides = [1, 1]} : vector<16x4xi32> to vector<16x1xi32>
    %c45_i32 = arith.constant 45 : i32
    %18 = vector.broadcast %c45_i32 : i32 to vector<16x1xi32>
    %19 = arith.addi %17, %18 : vector<16x1xi32>
    %20 = vector.broadcast %19 : vector<16x1xi32> to vector<16x128xi32>
    %21 = arith.cmpi eq, %5, %20 : vector<16x128xi32>
    %22 = arith.ori %16, %21 : vector<16x128xi1>
    %23 = vector.extract_strided_slice %4 {offsets = [0, 3], sizes = [16, 1], strides = [1, 1]} : vector<16x4xi32> to vector<16x1xi32>
    %c52_i32 = arith.constant 52 : i32
    %24 = vector.broadcast %c52_i32 : i32 to vector<16x1xi32>
    %25 = arith.addi %23, %24 : vector<16x1xi32>
    %26 = vector.broadcast %25 : vector<16x1xi32> to vector<16x128xi32>
    %27 = arith.cmpi eq, %5, %26 : vector<16x128xi32>
    %28 = arith.ori %22, %27 : vector<16x128xi1>
    %29 = arith.extui %28 : vector<16x128xi1> to vector<16x128xi32>
    %30 = arith.sitofp %29 : vector<16x128xi32> to vector<16x128xf32>
    %cst = arith.constant dense<0.000000e+00> : vector<16x32xf32>
    %31 = tpu.matmul %30, %0, %cst {dimension_numbers = #tpu.dot_dimension_numbers<[1], [0], [0], [1], [0, 0, 1, 1], [], []>} : vector<16x128xf32>, vector<128x32xf32>, vector<16x32xf32> -> vector<16x32xf32>
    %32 = arith.index_cast %2 : i32 to index
    %c0_3 = arith.constant 0 : index
    %33 = vector.load %arg3[%32, %c0_3] : memref<16x32xf32, #tpu.memory_space<vmem>>, vector<16x32xf32>
    tpu.vector_store %arg3[%32, %c0_3], %31 {strides = array<i32>} : memref<16x32xf32, #tpu.memory_space<vmem>>, vector<16x32xf32>,
    %c1_i32 = arith.constant 1 : i32
    return
  }
  func.func @transform_0(%arg0: i32) -> (i32, i32) {
    %c0_i32 = arith.constant 0 : i32
    %c0_i32_0 = arith.constant 0 : i32
    return %arg0, %c0_i32 : i32, i32
  }
  func.func @transform_1(%arg0: i32) -> (i32, i32) {
    %c0_i32 = arith.constant 0 : i32
    %c0_i32_0 = arith.constant 0 : i32
    %c0_i32_1 = arith.constant 0 : i32
    return %c0_i32, %c0_i32_0 : i32, i32
  }
  func.func @transform_2(%arg0: i32) -> (i32, i32) {
    %c0_i32 = arith.constant 0 : i32
    %c0_i32_0 = arith.constant 0 : i32
    return %arg0, %c0_i32 : i32, i32
  }
}

</mosaic_0001>

<llo_original>
// kernel: tpu_custom_call.1
$region0: #{tpu_custom_call.1}
  #allocation0 [shape = 'u32[]', space=smem, size = 0x4, offset = 0x4, fixed_abs, tag = 'smem constant byte address 0x4 - core index']
  #allocation1 [shape = 'u32[72,128]{1,0:T(1,128)}', space=vmem, size = 0x9000, scoped, tag = 'internal scratch']
  %s0 = inlined_call_operand.vmem [shape: s32[16,4], index: 0, kind: input, shape index: {}]
  %s1 = inlined_call_operand.vmem [shape: f32[128,32], index: 1, kind: input, shape index: {}]
  %s2 = inlined_call_operand.hbm [shape: f32[16,32], index: 2, kind: output, shape index: {}]
  %s3 = sld [smem:[#allocation0]]
  $region18: #{tpu_custom_call.1} parent=0
    _
  %s5 = ssub.s32 1, %s3
  %s6 = scalar_select 0, %s5, %s3
  $region1: #{tpu_custom_call.1} parent=0
    #allocation2 [shape = 'u8[8192]{0}', space=vmem, size = 0x2000, scoped, tag = 'output window, operand 0, single buffered']
    #allocation3 [shape = 's32[1]{0}', space=sflag, size = 0x4, scoped, tag = 'scoped memory for tpu_custom_call.1']
    %7 = vsyncpa [#allocation3], 0
    // Predicated region
    $region2: #{tpu_custom_call.1} parent=1 // pred_check
      _
    $region3: #{tpu_custom_call.1} parent=1 // pred_check_branch
      %9 = sbr.rel (0) target = $region5
    $region4: #{tpu_custom_call.1} parent=1 // pred_region
      _
    $region5: #{tpu_custom_call.1} parent=1 // pred_fallthru
      _
    // Predicated region
    $region6: #{tpu_custom_call.1} parent=1 // pred_check
      _
    $region7: #{tpu_custom_call.1} parent=1 // pred_check_branch
      %11 = sbr.rel (0) target = $region9
    $region8: #{tpu_custom_call.1} parent=1 // pred_region
      _
    $region9: #{tpu_custom_call.1} parent=1 // pred_fallthru
      _
    %v12 = vld [vmem:[%s1] sm:$0xff]
    %v13 = vld [vmem:[%s1 + $0x8] sm:$0xff]
    %v14 = vld [vmem:[%s1 + $0x10] sm:$0xff]
    %v15 = vld [vmem:[%s1 + $0x18] sm:$0xff]
    %v16 = vld [vmem:[%s1 + $0x20] sm:$0xff]
    %v17 = vld [vmem:[%s1 + $0x28] sm:$0xff]
    %v18 = vld [vmem:[%s1 + $0x30] sm:$0xff]
    %v19 = vld [vmem:[%s1 + $0x38] sm:$0xff]
    %v20 = vld [vmem:[%s1 + $0x40] sm:$0xff]
    %v21 = vld [vmem:[%s1 + $0x48] sm:$0xff]
    %v22 = vld [vmem:[%s1 + $0x50] sm:$0xff]
    %v23 = vld [vmem:[%s1 + $0x58] sm:$0xff]
    %v24 = vld [vmem:[%s1 + $0x60] sm:$0xff]
    %v25 = vld [vmem:[%s1 + $0x68] sm:$0xff]
    %v26 = vld [vmem:[%s1 + $0x70] sm:$0xff]
    %v27 = vld [vmem:[%s1 + $0x78] sm:$0xff]
    %v28 = vld [vmem:[%s0] sm:$0xff]
    %v29 = vld [vmem:[%s0 + $0x8] sm:$0xff]
    %v30 = vlaneseq
    %v31 = vand.u32 %v30, 127
    %32 = vset.pattern.permute.xlu0 0
    %33 = vperm.xlu0 %32, %v28
    %v34 = vpop.permute.xlu0 %33
    %35 = vset.pattern.permute.xlu0 0
    %36 = vperm.xlu0 %35, %v29
    %v37 = vpop.permute.xlu0 %36
    %vm38 = vcmp.eq.s32.totalorder %v31, %v34
    %vm39 = vcmp.eq.s32.totalorder %v31, %v37
    %v40 = vadd.s32 %v28, 13
    %v41 = vadd.s32 %v29, 13
    %42 = vset.pattern.permute.xlu0 1
    %43 = vperm.xlu0 %42, %v40
    %v44 = vpop.permute.xlu0 %43
    %45 = vset.pattern.permute.xlu0 1
    %46 = vperm.xlu0 %45, %v41
    %v47 = vpop.permute.xlu0 %46
    %vm48 = vcmp.eq.s32.totalorder %v31, %v44
    %vm49 = vcmp.eq.s32.totalorder %v31, %v47
    %vm50 = vmor %vm38, %vm48
    %vm51 = vmor %vm39, %vm49
    %v52 = vadd.s32 %v28, 45
    %v53 = vadd.s32 %v29, 45
    %54 = vset.pattern.permute.xlu0 2
    %55 = vperm.xlu0 %54, %v52
    %v56 = vpop.permute.xlu0 %55
    %57 = vset.pattern.permute.xlu0 2
    %58 = vperm.xlu0 %57, %v53
    %v59 = vpop.permute.xlu0 %58
    %vm60 = vcmp.eq.s32.totalorder %v31, %v56
    %vm61 = vcmp.eq.s32.totalorder %v31, %v59
    %vm62 = vmor %vm50, %vm60
    %vm63 = vmor %vm51, %vm61
    %v64 = vadd.s32 %v28, 52
    %v65 = vadd.s32 %v29, 52
    %66 = vset.pattern.permute.xlu0 3
    %67 = vperm.xlu0 %66, %v64
    %v68 = vpop.permute.xlu0 %67
    %69 = vset.pattern.permute.xlu0 3
    %70 = vperm.xlu0 %69, %v65
    %v71 = vpop.permute.xlu0 %70
    %vm72 = vcmp.eq.s32.totalorder %v31, %v68
    %vm73 = vcmp.eq.s32.totalorder %v31, %v71
    %vm74 = vmor %vm62, %vm72
    %vm75 = vmor %vm63, %vm73
    %v76 = vsel %vm74, 1, 0
    %v77 = vsel %vm75, 1, 0
    %v78 = vcvt.s32.f32 %v76
    %v79 = vcvt.s32.f32 %v77
    %80 = vmatpush.msra.mxu0 %v27
    %81 = vmatpush.msra.mxu0 %v26
    %82 = vmatpush.msra.mxu0 %v25
    %83 = vmatpush.msra.mxu0 %v24
    %84 = vmatpush.msra.mxu0 %v23
    %85 = vmatpush.msra.mxu0 %v22
    %86 = vmatpush.msra.mxu0 %v21
    %87 = vmatpush.msra.mxu0 %v20
    %88 = vmatpush.msra.mxu0 %v19
    %89 = vmatpush.msra.mxu0 %v18
    %90 = vmatpush.msra.mxu0 %v17
    %91 = vmatpush.msra.mxu0 %v16
    %92 = vmatpush.msra.mxu0 %v15
    %93 = vmatpush.msra.mxu0 %v14
    %94 = vmatpush.msra.mxu0 %v13
    %95 = vmatpush.msra.mxu0 %v12
    %96 = vmatmul.f32.gmra.mxu0 %v78
    %v97 = vpop.f32.mrf.mxu0
    %v98 = vadd.f32 0.0, %v97
    %99 = vmatmul.f32.gmra.mxu0 %v79
    %v100 = vpop.f32.mrf.mxu0
    %v101 = vadd.f32 0.0, %v100
    %102 = vdwg.mxu0
    %vm103 = vcmask 261120
    %104 = vst.msk [vmem:[#allocation2] sm:$0xff] %vm103, %v98
    %105 = vst.msk [vmem:[#allocation2 + $0x8] sm:$0xff] %vm103, %v101
    // Predicated region
    $region10: #{tpu_custom_call.1} parent=1 // pred_check
      _
    $region11: #{tpu_custom_call.1} parent=1 // pred_check_branch
      %107 = sbr.rel (0) target = $region13
    $region12: #{tpu_custom_call.1} parent=1 // pred_region
      %109 = vsyncadd [#allocation3], 0
      %s110 = sshll.u32 [#allocation2], 4
      %s111 = int_to_ptr.vmem [resolvable:$true] %s110
      %s112 = sshll.u32 %s2, 4
      %s113 = int_to_ptr.hbm [resolvable:$true] %s112
      %118 = dma.vmem_to_hbm [thread:$0]  %s111, 256, %s113, [#allocation3], 128, 128, 8
    $region13: #{tpu_custom_call.1} parent=1 // pred_fallthru
      _
    // Predicated region
    $region14: #{tpu_custom_call.1} parent=1 // pred_check
      _
    $region15: #{tpu_custom_call.1} parent=1 // pred_check_branch
      %120 = sbr.rel (0) target = $region17
    $region16: #{tpu_custom_call.1} parent=1 // pred_region
      %122 = dma.done [#allocation3], 256
    $region17: #{tpu_custom_call.1} parent=1 // pred_fallthru
      _
    %123 = vsyncpa [#allocation3], 1

</llo_original>
